<compile_context>
chip_gen: v5e
topology: v5e:2x2
jax: 0.10.0
libtpu: 0.0.40
codegen_flags: <defaults>
</compile_context>

<pallas_src>
import jax
import jax.numpy as jnp
from jax.experimental import pallas as pl
from jax.experimental.pallas import tpu as pltpu


def qnet_kernel(x_ref, w1_ref, b1_ref, w2_ref, b2_ref, w3t_ref, b3_ref, o_ref):
    x = x_ref[...]                      # (TB, 4)  f32
    w1 = w1_ref[...]                    # (4, 128) f32

    # fc1 + ReLU: contraction dim is 4 -> do it on the VPU as 4 broadcast-FMAs
    # instead of a degenerate MXU matmul.
    h1 = b1_ref[...]                    # (1, 128) broadcasts against (TB, 128)
    h1 = h1 + x[:, 0:1] * w1[0:1, :]
    h1 = h1 + x[:, 1:2] * w1[1:2, :]
    h1 = h1 + x[:, 2:3] * w1[2:3, :]
    h1 = h1 + x[:, 3:4] * w1[3:4, :]
    h1 = jnp.maximum(h1, 0.0)           # (TB, 128) f32

    # fc2 + ReLU: the one clean 128x128 MXU matmul, bf16 operands, f32 accumulate.
    h2 = jnp.dot(h1.astype(jnp.bfloat16), w2_ref[...],
                 preferred_element_type=jnp.float32)
    h2 = jnp.maximum(h2 + b2_ref[...], 0.0)   # (TB, 128) f32

    # fc3 (128 -> 2): two cross-lane reductions on the XLU; the MXU stays free
    # and we avoid a 2-column matmul.  w3t rows are lane-aligned (2, 128).
    w3t = w3t_ref[...]
    o0 = jnp.sum(h2 * w3t[0:1, :], axis=-1, keepdims=True)   # (TB, 1)
    o1 = jnp.sum(h2 * w3t[1:2, :], axis=-1, keepdims=True)   # (TB, 1)
    out = jnp.concatenate([o0, o1], axis=-1) + b3_ref[...]   # (TB, 2)
    o_ref[...] = out.astype(o_ref.dtype)


def _round_up(n, m):
    return ((n + m - 1) // m) * m


def qnet_forward(x, params, block_b=2048):
    """x: (B, 4) float32.  params: dict of w1,b1,w2,b2,w3,b3 (weights as (in, out))."""
    B, F = x.shape
    w1, b1 = params["w1"], params["b1"]
    w2, b2 = params["w2"], params["b2"]
    w3, b3 = params["w3"], params["b3"]
    n_out = w3.shape[1]

    # Batch tiling: small batches collapse to a single 8-aligned block; big
    # batches use block_b-row tiles (per-tile VMEM footprint with double
    # buffering is ~2 MiB at TB=2048, far under every chip's scoped VMEM).
    TB = min(block_b, _round_up(B, 8))
    Bp = _round_up(B, TB)
    if Bp != B:
        x = jnp.pad(x, ((0, Bp - B), (0, 0)))
    x = x.astype(jnp.float32)

    w2_bf16 = w2.astype(jnp.bfloat16)   # bf16 operand for the MXU matmul
    w3t = jnp.transpose(w3)             # (2, 128): lane-aligned rows for the reductions

    const2 = lambda i: (0, 0)           # weights/biases resident across grid steps

    out = pl.pallas_call(
        qnet_kernel,
        out_shape=jax.ShapeDtypeStruct((Bp, n_out), jnp.float32),
        grid_spec=pltpu.PrefetchScalarGridSpec(
            num_scalar_prefetch=0,
            grid=(Bp // TB,),
            in_specs=[
                pl.BlockSpec((TB, F), lambda i: (i, 0)),   # x tile (double-buffered)
                pl.BlockSpec(w1.shape, const2),
                pl.BlockSpec(b1.shape, const2),
                pl.BlockSpec(w2_bf16.shape, const2),
                pl.BlockSpec(b2.shape, const2),
                pl.BlockSpec(w3t.shape, const2),
                pl.BlockSpec(b3.shape, const2),
            ],
            out_specs=pl.BlockSpec((TB, n_out), lambda i: (i, 0)),
        ),
        compiler_params=pltpu.CompilerParams(
            dimension_semantics=("parallel",)),   # megacore-shard the batch axis on v7x
    )(x, w1, b1, w2_bf16, b2, w3t, b3)

    return out[:B]


def init_params(key):
    """Deterministic init matching the PyTorch layer shapes.

    torch stores Linear weight as (out, in); we store the transpose (in, out)
    so the kernel computes x @ W directly.
    """
    k1, k2, k3, k4, k5, k6 = jax.random.split(key, 6)

    def uniform(k, shape, fan_in):
        bound = 1.0 / jnp.sqrt(fan_in)
        return jax.random.uniform(k, shape, jnp.float32, -bound, bound)

    return {
        "w1": uniform(k1, (4, 128), 4.0),
        "b1": uniform(k2, (1, 128), 4.0),
        "w2": uniform(k3, (128, 128), 128.0),
        "b2": uniform(k4, (1, 128), 128.0),
        "w3": uniform(k5, (128, 2), 128.0),
        "b3": uniform(k6, (1, 2), 128.0),
    }


def qnet_reference(x, params):
    h1 = jnp.maximum(x @ params["w1"] + params["b1"], 0.0)
    h2 = jnp.maximum(h1 @ params["w2"] + params["b2"], 0.0)
    return h2 @ params["w3"] + params["b3"]


if __name__ == "__main__":
    key = jax.random.PRNGKey(0)
    kx, kx2, kp = jax.random.split(key, 3)
    params = init_params(kp)

    # Small CartPole-style batch (single-block path).
    B = 8
    x = jax.random.normal(kx, (B, 4), dtype=jnp.float32)
    out = jax.block_until_ready(qnet_forward(x, params))
    ref = qnet_reference(x, params)
    assert out.shape == (B, 2), out.shape
    # fc2 runs with bf16 operands (f32 accumulation) -> allow bf16-level tolerance.
    assert jnp.allclose(out, ref, atol=1e-2, rtol=1e-2), "mismatch vs reference (small)"

    # Larger, non-multiple batch to exercise padding + multi-step grid pipeline.
    B2 = 200
    x2 = jax.random.normal(kx2, (B2, 4), dtype=jnp.float32)
    out2 = jax.block_until_ready(qnet_forward(x2, params, block_b=64))
    ref2 = qnet_reference(x2, params)
    assert out2.shape == (B2, 2), out2.shape
    assert jnp.allclose(out2, ref2, atol=1e-2, rtol=1e-2), "mismatch vs reference (gridded)"

    print("KERNEL_OK")
</pallas_src>

<mosaic_0001>
module attributes {stable_mosaic.version = 11 : i64} {
  func.func @qnet_kernel(%arg0: i32, %arg1: memref<8x4xf32, #tpu.memory_space<vmem>>, %arg2: memref<4x128xf32, #tpu.memory_space<vmem>>, %arg3: memref<1x128xf32, #tpu.memory_space<vmem>>, %arg4: memref<128x128xbf16, #tpu.memory_space<vmem>>, %arg5: memref<1x128xf32, #tpu.memory_space<vmem>>, %arg6: memref<2x128xf32, #tpu.memory_space<vmem>>, %arg7: memref<1x2xf32, #tpu.memory_space<vmem>>, %arg8: memref<8x2xf32, #tpu.memory_space<vmem>>) attributes {dimension_semantics = [#tpu.dimension_semantics<parallel>], iteration_bounds = array<i64: 1>, scalar_prefetch = 0 : i64, scratch_operands = 0 : i64, tpu.core_type = #tpu.core_type<tc>, window_params = [{transform_indices = @transform_0, window_bounds = array<i64: 8, 4>}, {pipeline_mode = #tpu.pipeline_mode<synchronous>, transform_indices = @transform_1, window_bounds = array<i64: 4, 128>}, {pipeline_mode = #tpu.pipeline_mode<synchronous>, transform_indices = @transform_2, window_bounds = array<i64: 1, 128>}, {pipeline_mode = #tpu.pipeline_mode<synchronous>, transform_indices = @transform_3, window_bounds = array<i64: 128, 128>}, {pipeline_mode = #tpu.pipeline_mode<synchronous>, transform_indices = @transform_4, window_bounds = array<i64: 1, 128>}, {pipeline_mode = #tpu.pipeline_mode<synchronous>, transform_indices = @transform_5, window_bounds = array<i64: 2, 128>}, {pipeline_mode = #tpu.pipeline_mode<synchronous>, transform_indices = @transform_6, window_bounds = array<i64: 1, 2>}, {transform_indices = @transform_7, window_bounds = array<i64: 8, 2>}]} {
    %c0 = arith.constant 0 : index
    %c0_0 = arith.constant 0 : index
    %0 = vector.load %arg1[%c0, %c0_0] : memref<8x4xf32, #tpu.memory_space<vmem>>, vector<8x4xf32>
    %c0_1 = arith.constant 0 : index
    %c0_2 = arith.constant 0 : index
    %1 = vector.load %arg2[%c0_1, %c0_2] : memref<4x128xf32, #tpu.memory_space<vmem>>, vector<4x128xf32>
    %c0_3 = arith.constant 0 : index
    %c0_4 = arith.constant 0 : index
    %2 = vector.load %arg3[%c0_3, %c0_4] : memref<1x128xf32, #tpu.memory_space<vmem>>, vector<1x128xf32>
    %3 = vector.extract_strided_slice %0 {offsets = [0, 0], sizes = [8, 1], strides = [1, 1]} : vector<8x4xf32> to vector<8x1xf32>
    %4 = vector.extract_strided_slice %1 {offsets = [0, 0], sizes = [1, 128], strides = [1, 1]} : vector<4x128xf32> to vector<1x128xf32>
    %5 = vector.broadcast %3 : vector<8x1xf32> to vector<8x128xf32>
    %6 = vector.broadcast %4 : vector<1x128xf32> to vector<8x128xf32>
    %7 = arith.mulf %5, %6 : vector<8x128xf32>
    %8 = vector.broadcast %2 : vector<1x128xf32> to vector<8x128xf32>
    %9 = arith.addf %8, %7 : vector<8x128xf32>
    %10 = vector.extract_strided_slice %0 {offsets = [0, 1], sizes = [8, 1], strides = [1, 1]} : vector<8x4xf32> to vector<8x1xf32>
    %11 = vector.extract_strided_slice %1 {offsets = [1, 0], sizes = [1, 128], strides = [1, 1]} : vector<4x128xf32> to vector<1x128xf32>
    %12 = vector.broadcast %10 : vector<8x1xf32> to vector<8x128xf32>
    %13 = vector.broadcast %11 : vector<1x128xf32> to vector<8x128xf32>
    %14 = arith.mulf %12, %13 : vector<8x128xf32>
    %15 = arith.addf %9, %14 : vector<8x128xf32>
    %16 = vector.extract_strided_slice %0 {offsets = [0, 2], sizes = [8, 1], strides = [1, 1]} : vector<8x4xf32> to vector<8x1xf32>
    %17 = vector.extract_strided_slice %1 {offsets = [2, 0], sizes = [1, 128], strides = [1, 1]} : vector<4x128xf32> to vector<1x128xf32>
    %18 = vector.broadcast %16 : vector<8x1xf32> to vector<8x128xf32>
    %19 = vector.broadcast %17 : vector<1x128xf32> to vector<8x128xf32>
    %20 = arith.mulf %18, %19 : vector<8x128xf32>
    %21 = arith.addf %15, %20 : vector<8x128xf32>
    %22 = vector.extract_strided_slice %0 {offsets = [0, 3], sizes = [8, 1], strides = [1, 1]} : vector<8x4xf32> to vector<8x1xf32>
    %23 = vector.extract_strided_slice %1 {offsets = [3, 0], sizes = [1, 128], strides = [1, 1]} : vector<4x128xf32> to vector<1x128xf32>
    %24 = vector.broadcast %22 : vector<8x1xf32> to vector<8x128xf32>
    %25 = vector.broadcast %23 : vector<1x128xf32> to vector<8x128xf32>
    %26 = arith.mulf %24, %25 : vector<8x128xf32>
    %27 = arith.addf %21, %26 : vector<8x128xf32>
    %cst = arith.constant 0.000000e+00 : f32
    %28 = vector.broadcast %cst : f32 to vector<8x128xf32>
    %29 = arith.maximumf %27, %28 : vector<8x128xf32>
    %30 = arith.truncf %29 : vector<8x128xf32> to vector<8x128xbf16>
    %c0_5 = arith.constant 0 : index
    %c0_6 = arith.constant 0 : index
    %31 = vector.load %arg4[%c0_5, %c0_6] : memref<128x128xbf16, #tpu.memory_space<vmem>>, vector<128x128xbf16>
    %cst_7 = arith.constant dense<0.000000e+00> : vector<8x128xf32>
    %32 = tpu.matmul %30, %31, %cst_7 {dimension_numbers = #tpu.dot_dimension_numbers<[1], [0], [0], [1], [0, 0, 1, 1], [], []>} : vector<8x128xbf16>, vector<128x128xbf16>, vector<8x128xf32> -> vector<8x128xf32>
    %c0_8 = arith.constant 0 : index
    %c0_9 = arith.constant 0 : index
    %33 = vector.load %arg5[%c0_8, %c0_9] : memref<1x128xf32, #tpu.memory_space<vmem>>, vector<1x128xf32>
    %34 = vector.broadcast %33 : vector<1x128xf32> to vector<8x128xf32>
    %35 = arith.addf %32, %34 : vector<8x128xf32>
    %cst_10 = arith.constant 0.000000e+00 : f32
    %36 = vector.broadcast %cst_10 : f32 to vector<8x128xf32>
    %37 = arith.maximumf %35, %36 : vector<8x128xf32>
    %c0_11 = arith.constant 0 : index
    %c0_12 = arith.constant 0 : index
    %38 = vector.load %arg6[%c0_11, %c0_12] : memref<2x128xf32, #tpu.memory_space<vmem>>, vector<2x128xf32>
    %39 = vector.extract_strided_slice %38 {offsets = [0, 0], sizes = [1, 128], strides = [1, 1]} : vector<2x128xf32> to vector<1x128xf32>
    %40 = vector.broadcast %39 : vector<1x128xf32> to vector<8x128xf32>
    %41 = arith.mulf %37, %40 : vector<8x128xf32>
    %cst_13 = arith.constant dense<0.000000e+00> : vector<8xf32>
    %42 = vector.multi_reduction <add>, %41, %cst_13 [1] : vector<8x128xf32> to vector<8xf32>
    %43 = vector.shape_cast %42 : vector<8xf32> to vector<8x1xf32>
    %44 = vector.extract_strided_slice %38 {offsets = [1, 0], sizes = [1, 128], strides = [1, 1]} : vector<2x128xf32> to vector<1x128xf32>
    %45 = vector.broadcast %44 : vector<1x128xf32> to vector<8x128xf32>
    %46 = arith.mulf %37, %45 : vector<8x128xf32>
    %cst_14 = arith.constant dense<0.000000e+00> : vector<8xf32>
    %47 = vector.multi_reduction <add>, %46, %cst_14 [1] : vector<8x128xf32> to vector<8xf32>
    %48 = vector.shape_cast %47 : vector<8xf32> to vector<8x1xf32>
    %49 = tpu.concatenate %43, %48 in 1 : vector<8x1xf32>, vector<8x1xf32> -> vector<8x2xf32>
    %c0_15 = arith.constant 0 : index
    %c0_16 = arith.constant 0 : index
    %50 = vector.load %arg7[%c0_15, %c0_16] : memref<1x2xf32, #tpu.memory_space<vmem>>, vector<1x2xf32>
    %51 = vector.broadcast %50 : vector<1x2xf32> to vector<8x2xf32>
    %52 = arith.addf %49, %51 : vector<8x2xf32>
    %c0_17 = arith.constant 0 : index
    %c0_18 = arith.constant 0 : index
    %53 = vector.load %arg8[%c0_17, %c0_18] : memref<8x2xf32, #tpu.memory_space<vmem>>, vector<8x2xf32>
    tpu.vector_store %arg8[%c0_17, %c0_18], %52 {strides = array<i32>} : memref<8x2xf32, #tpu.memory_space<vmem>>, vector<8x2xf32>,
    return
  }
  func.func @transform_0(%arg0: i32) -> (i32, i32) {
    %c0_i32 = arith.constant 0 : i32
    %c0_i32_0 = arith.constant 0 : i32
    return %arg0, %c0_i32 : i32, i32
  }
  func.func @transform_1(%arg0: i32) -> (i32, i32) {
    %c0_i32 = arith.constant 0 : i32
    %c0_i32_0 = arith.constant 0 : i32
    %c0_i32_1 = arith.constant 0 : i32
    return %c0_i32, %c0_i32_0 : i32, i32
  }
  func.func @transform_2(%arg0: i32) -> (i32, i32) {
    %c0_i32 = arith.constant 0 : i32
    %c0_i32_0 = arith.constant 0 : i32
    %c0_i32_1 = arith.constant 0 : i32
    return %c0_i32, %c0_i32_0 : i32, i32
  }
  func.func @transform_3(%arg0: i32) -> (i32, i32) {
    %c0_i32 = arith.constant 0 : i32
    %c0_i32_0 = arith.constant 0 : i32
    %c0_i32_1 = arith.constant 0 : i32
    return %c0_i32, %c0_i32_0 : i32, i32
  }
  func.func @transform_4(%arg0: i32) -> (i32, i32) {
    %c0_i32 = arith.constant 0 : i32
    %c0_i32_0 = arith.constant 0 : i32
    %c0_i32_1 = arith.constant 0 : i32
    return %c0_i32, %c0_i32_0 : i32, i32
  }
  func.func @transform_5(%arg0: i32) -> (i32, i32) {
    %c0_i32 = arith.constant 0 : i32
    %c0_i32_0 = arith.constant 0 : i32
    %c0_i32_1 = arith.constant 0 : i32
    return %c0_i32, %c0_i32_0 : i32, i32
  }
  func.func @transform_6(%arg0: i32) -> (i32, i32) {
    %c0_i32 = arith.constant 0 : i32
    %c0_i32_0 = arith.constant 0 : i32
    %c0_i32_1 = arith.constant 0 : i32
    return %c0_i32, %c0_i32_0 : i32, i32
  }
  func.func @transform_7(%arg0: i32) -> (i32, i32) {
    %c0_i32 = arith.constant 0 : i32
    %c0_i32_0 = arith.constant 0 : i32
    return %arg0, %c0_i32 : i32, i32
  }
}

</mosaic_0001>

<llo_original>
// kernel: tpu_custom_call.1
$region0: #{tpu_custom_call.1}
  #allocation0 [shape = 'u32[]', space=smem, size = 0x4, offset = 0x4, fixed_abs, tag = 'smem constant byte address 0x4 - core index']
  #allocation1 [shape = 'u32[72,128]{1,0:T(1,128)}', space=vmem, size = 0x9000, scoped, tag = 'internal scratch']
  %s0 = inlined_call_operand.vmem [shape: f32[8,4], index: 0, kind: input, shape index: {}]
  %s1 = inlined_call_operand.vmem [shape: f32[4,128], index: 1, kind: input, shape index: {}]
  %s2 = inlined_call_operand.vmem [shape: f32[1,128], index: 2, kind: input, shape index: {}]
  %s3 = inlined_call_operand.hbm [shape: bf16[128,128], index: 3, kind: input, shape index: {}]
  %s4 = inlined_call_operand.vmem [shape: f32[1,128], index: 4, kind: input, shape index: {}]
  %s5 = inlined_call_operand.vmem [shape: f32[2,128], index: 5, kind: input, shape index: {}]
  %s6 = inlined_call_operand.vmem [shape: f32[1,2], index: 6, kind: input, shape index: {}]
  %s7 = inlined_call_operand.vmem [shape: f32[8,2], index: 7, kind: output, shape index: {}]
  %s8 = sld [smem:[#allocation0]]
  $region42: #{tpu_custom_call.1} parent=0
    _
  %s10 = ssub.s32 1, %s8
  %s11 = scalar_select 0, %s10, %s8
  $region1: #{tpu_custom_call.1} parent=0
    #allocation2 [shape = 'u8[32768]{0}', space=vmem, size = 0x8000, scoped, tag = 'input window, operand 3, single buffered']
    #allocation3 [shape = 's32[1]{0}', space=sflag, size = 0x4, scoped, tag = 'scoped memory for tpu_custom_call.1']
    %12 = vsyncpa [#allocation3], 0
    // Predicated region
    $region2: #{tpu_custom_call.1} parent=1 // pred_check
      _
    $region3: #{tpu_custom_call.1} parent=1 // pred_check_branch
      %14 = sbr.rel (0) target = $region5
    $region4: #{tpu_custom_call.1} parent=1 // pred_region
      _
    $region5: #{tpu_custom_call.1} parent=1 // pred_fallthru
      _
    // Predicated region
    $region6: #{tpu_custom_call.1} parent=1 // pred_check
      _
    $region7: #{tpu_custom_call.1} parent=1 // pred_check_branch
      %16 = sbr.rel (0) target = $region9
    $region8: #{tpu_custom_call.1} parent=1 // pred_region
      _
    $region9: #{tpu_custom_call.1} parent=1 // pred_fallthru
      _
    // Predicated region
    $region10: #{tpu_custom_call.1} parent=1 // pred_check
      _
    $region11: #{tpu_custom_call.1} parent=1 // pred_check_branch
      %18 = sbr.rel (0) target = $region13
    $region12: #{tpu_custom_call.1} parent=1 // pred_region
      _
    $region13: #{tpu_custom_call.1} parent=1 // pred_fallthru
      _
    // Predicated region
    $region14: #{tpu_custom_call.1} parent=1 // pred_check
      _
    $region15: #{tpu_custom_call.1} parent=1 // pred_check_branch
      %20 = sbr.rel (0) target = $region17
    $region16: #{tpu_custom_call.1} parent=1 // pred_region
      %22 = vsyncadd [#allocation3], 0
      %s23 = sshll.u32 %s3, 4
      %s24 = int_to_ptr.hbm [resolvable:$true] %s23
      %s25 = sshll.u32 [#allocation2], 4
      %s26 = int_to_ptr.vmem [resolvable:$true] %s25
      %31 = dma.hbm_to_vmem [thread:$0]  %s24, 1024, %s26, [#allocation3], 64, 64, 4
    $region17: #{tpu_custom_call.1} parent=1 // pred_fallthru
      _
    // Predicated region
    $region18: #{tpu_custom_call.1} parent=1 // pred_check
      _
    $region19: #{tpu_custom_call.1} parent=1 // pred_check_branch
      %33 = sbr.rel (0) target = $region21
    $region20: #{tpu_custom_call.1} parent=1 // pred_region
      _
    $region21: #{tpu_custom_call.1} parent=1 // pred_fallthru
      _
    // Predicated region
    $region22: #{tpu_custom_call.1} parent=1 // pred_check
      _
    $region23: #{tpu_custom_call.1} parent=1 // pred_check_branch
      %35 = sbr.rel (0) target = $region25
    $region24: #{tpu_custom_call.1} parent=1 // pred_region
      _
    $region25: #{tpu_custom_call.1} parent=1 // pred_fallthru
      _
    // Predicated region
    $region26: #{tpu_custom_call.1} parent=1 // pred_check
      _
    $region27: #{tpu_custom_call.1} parent=1 // pred_check_branch
      %37 = sbr.rel (0) target = $region29
    $region28: #{tpu_custom_call.1} parent=1 // pred_region
      _
    $region29: #{tpu_custom_call.1} parent=1 // pred_fallthru
      _
    // Predicated region
    $region30: #{tpu_custom_call.1} parent=1 // pred_check
      _
    $region31: #{tpu_custom_call.1} parent=1 // pred_check_branch
      %39 = sbr.rel (0) target = $region33
    $region32: #{tpu_custom_call.1} parent=1 // pred_region
      %41 = dma.done [#allocation3], 1024
    $region33: #{tpu_custom_call.1} parent=1 // pred_fallthru
      _
    %v42 = vld [vmem:[%s0] sm:$0xff]
    %v43 = vld [vmem:[%s1] sm:$0xf]
    %v44 = vld [vmem:[%s2] sm:$0x1]
    %46 = vset.pattern.permute.xlu0 0
    %47 = vperm.xlu0 %46, %v42
    %v48 = vpop.permute.xlu0 %47
    %v50 = vperm.slane %v43, 0
    %v51 = vmul.f32 %v48, %v50
    %v53 = vperm.slane %v44, 0
    %v55 = vadd.f32 %v53, %v51
    %56 = vset.pattern.permute.xlu0 1
    %57 = vperm.xlu0 %56, %v42
    %v58 = vpop.permute.xlu0 %57
    %v60 = vperm.slane %v43, 1
    %v61 = vmul.f32 %v58, %v60
    %v62 = vadd.f32 %v55, %v61
    %63 = vset.pattern.permute.xlu0 2
    %64 = vperm.xlu0 %63, %v42
    %v65 = vpop.permute.xlu0 %64
    %v67 = vperm.slane %v43, 2
    %v68 = vmul.f32 %v65, %v67
    %v69 = vadd.f32 %v62, %v68
    %70 = vset.pattern.permute.xlu0 3
    %71 = vperm.xlu0 %70, %v42
    %v72 = vpop.permute.xlu0 %71
    %v74 = vperm.slane %v43, 3
    %v75 = vmul.f32 %v72, %v74
    %v76 = vadd.f32 %v69, %v75
    %v77 = vmax.f32 %v76, 0.0
    %v78 = vpack.c.bf16 %v77, %v77
    %v79 = vld [vmem:[#allocation2] sm:$0xf]
    %v80 = vld [vmem:[#allocation2 + $0x4] sm:$0xf]
    %v81 = vld [vmem:[#allocation2 + $0x8] sm:$0xf]
    %v82 = vld [vmem:[#allocation2 + $0xc] sm:$0xf]
    %v83 = vld [vmem:[#allocation2 + $0x10] sm:$0xf]
    %v84 = vld [vmem:[#allocation2 + $0x14] sm:$0xf]
    %v85 = vld [vmem:[#allocation2 + $0x18] sm:$0xf]
    %v86 = vld [vmem:[#allocation2 + $0x1c] sm:$0xf]
    %v87 = vld [vmem:[#allocation2 + $0x20] sm:$0xf]
    %v88 = vld [vmem:[#allocation2 + $0x24] sm:$0xf]
    %v89 = vld [vmem:[#allocation2 + $0x28] sm:$0xf]
    %v90 = vld [vmem:[#allocation2 + $0x2c] sm:$0xf]
    %v91 = vld [vmem:[#allocation2 + $0x30] sm:$0xf]
    %v92 = vld [vmem:[#allocation2 + $0x34] sm:$0xf]
    %v93 = vld [vmem:[#allocation2 + $0x38] sm:$0xf]
    %v94 = vld [vmem:[#allocation2 + $0x3c] sm:$0xf]
    %v95 = vld [vmem:[%s4] sm:$0x1]
    %v97 = vperm.slane %v95, 0
    %v115 = vunpack.c.l.b16 %v79
    %v116 = vunpack.c.l.b16 %v80
    %v117 = vunpack.c.l.b16 %v81
    %v118 = vunpack.c.l.b16 %v82
    %v119 = vunpack.c.l.b16 %v83
    %v120 = vunpack.c.l.b16 %v84
    %v121 = vunpack.c.l.b16 %v85
    %v122 = vunpack.c.l.b16 %v86
    %v123 = vunpack.c.l.b16 %v87
    %v124 = vunpack.c.l.b16 %v88
    %v125 = vunpack.c.l.b16 %v89
    %v126 = vunpack.c.l.b16 %v90
    %v127 = vunpack.c.l.b16 %v91
    %v128 = vunpack.c.l.b16 %v92
    %v129 = vunpack.c.l.b16 %v93
    %v130 = vunpack.c.l.b16 %v94
    %v131 = vpack.c.b16 %v116, %v115
    %v132 = vpack.c.b16 %v118, %v117
    %v133 = vpack.c.b16 %v120, %v119
    %v134 = vpack.c.b16 %v122, %v121
    %v135 = vpack.c.b16 %v124, %v123
    %v136 = vpack.c.b16 %v126, %v125
    %v137 = vpack.c.b16 %v128, %v127
    %v138 = vpack.c.b16 %v130, %v129
    %147 = vmatpush.bf16.msra.mxu0 %v138
    %148 = vmatpush.bf16.msra.mxu0 %v137
    %149 = vmatpush.bf16.msra.mxu0 %v136
    %150 = vmatpush.bf16.msra.mxu0 %v135
    %151 = vmatpush.bf16.msra.mxu0 %v134
    %152 = vmatpush.bf16.msra.mxu0 %v133
    %153 = vmatpush.bf16.msra.mxu0 %v132
    %154 = vmatpush.bf16.msra.mxu0 %v131
    %155 = vmatmul.bf16.gmra.mxu0 %v78
    %v156 = vpop.f32.mrf.mxu0
    %v157 = vadd.f32 %v97, %v156
    %v158 = vpop.f32.mrf.mxu0
    %159 = vdwg.mxu0
    %v160 = vmax.f32 %v157, 0.0
    %v161 = vld [vmem:[%s5] sm:$0x3]
    %v162 = vperm.slane %v161, 0
    %v163 = vmul.f32 %v160, %v162
    %164 = vadd.xlane.f32.xlu0 %v163
    %v165 = vpop.xlane.xlu0 %164
    %v166 = vperm.slane %v161, 1
    %v167 = vmul.f32 %v160, %v166
    %168 = vadd.xlane.f32.xlu0 %v167
    %v169 = vpop.xlane.xlu0 %168
    %vm170 = vcmask 7168
    %v171 = vsel %vm170, %v165, %v169
    %v172 = vld [vmem:[%s6] sm:$0x1]
    %v174 = vperm.slane %v172, 0
    %v176 = vadd.f32 %v171, %v174
    %vm177 = vcmask 15360
    %178 = vst.msk [vmem:[%s7] sm:$0xff] %vm177, %v176
    // Predicated region
    $region34: #{tpu_custom_call.1} parent=1 // pred_check
      _
    $region35: #{tpu_custom_call.1} parent=1 // pred_check_branch
      %180 = sbr.rel (0) target = $region37
    $region36: #{tpu_custom_call.1} parent=1 // pred_region
      _
    $region37: #{tpu_custom_call.1} parent=1 // pred_fallthru
      _
    // Predicated region
    $region38: #{tpu_custom_call.1} parent=1 // pred_check
      _
    $region39: #{tpu_custom_call.1} parent=1 // pred_check_branch
      %182 = sbr.rel (0) target = $region41
    $region40: #{tpu_custom_call.1} parent=1 // pred_region
      _
    $region41: #{tpu_custom_call.1} parent=1 // pred_fallthru
      _
    %183 = vsyncpa [#allocation3], 1

</llo_original>
